<compile_context>
chip_gen: v5e
topology: v5e:2x2
jax: 0.10.0
libtpu: 0.0.40
codegen_flags: <defaults>
</compile_context>

<pallas_src>
import jax
import jax.numpy as jnp
from jax.experimental import pallas as pl
from jax.experimental.pallas import tpu as pltpu


def _attention_kernel(enc_ref, dec_ref,
                      we_ref, be_ref, wd_ref, bd_ref, wf_ref, bf_ref,
                      ctx_ref, alpha_ref):
    enc = enc_ref[...]                                    # (TB, N, E)
    dec = dec_ref[...]                                    # (TB, D)
    TB, N, E = enc.shape
    A = we_ref.shape[1]

    # ---- encoder / decoder projections (MXU) --------------------------------
    # Fold the batch into the matmul rows: one (TB*N, E) @ (E, A) matmul.
    enc_flat = enc.reshape(TB * N, E)
    att1 = jnp.dot(enc_flat, we_ref[...],
                   preferred_element_type=jnp.float32) + be_ref[...]         # (TB*N, A)
    att2 = jnp.dot(dec, wd_ref[...],
                   preferred_element_type=jnp.float32) + bd_ref[...]         # (TB, A)

    att = jnp.tanh(att1.reshape(TB, N, A) + att2[:, None, :])                # (TB, N, A)

    # ---- logits, lane-major: e is (TB, N) with N on the 128-lane axis -------
    wf_row = wf_ref[...].reshape(1, 1, A)                                    # (1, 1, A)
    e = jnp.sum(att * wf_row, axis=-1) + bf_ref[...]                         # (TB, N)

    # ---- softmax over N (lane reduce) ---------------------------------------
    m = jnp.max(e, axis=-1, keepdims=True)                                   # (TB, 1)
    p = jnp.exp(e - m)
    denom = jnp.sum(p, axis=-1, keepdims=True)                               # (TB, 1)
    # Exact divide kept on purpose: pl.reciprocal(approx=True) (EUP vrcp) is
    # cheaper but can exceed the 1e-5 verification tolerance; this divide is
    # one value per batch row, so the cost is negligible.
    alpha = p / denom                                                        # (TB, N)

    # ---- context on the MXU: (TB, 1, N) @ (TB, N, E) -> (TB, 1, E) ----------
    ctx = jnp.einsum('bqn,bne->bqe', alpha[:, None, :], enc,
                     preferred_element_type=jnp.float32)                     # (TB, 1, E)

    ctx_ref[...] = ctx[:, 0, :].astype(ctx_ref.dtype)                        # (TB, E)
    alpha_ref[...] = alpha.astype(alpha_ref.dtype)                           # (TB, N) lane-dense


def _pick_block_batch(B, N, E, target_rows=256, max_enc_block_bytes=4 * 1024 * 1024):
    """How many batch rows to fold into one grid step.

    Prefers TB that is a multiple of 8 (sublane aligned) and divides B, keeps
    TB*N near an MXU-friendly row count, caps the (double-buffered) f32
    encoder block so it fits comfortably even in v7x's 64 MiB VMEM, and keeps
    at least 2 grid steps when possible so "parallel" can use both v7x cores.
    Falls back to the whole batch (full-extent block is always legal).
    """
    def block_ok(tb):
        return 2 * tb * N * E * 4 <= max_enc_block_bytes   # double-buffered f32

    best = B if block_ok(B) else 1
    cand = 8
    while cand < B:
        if B % cand == 0 and cand * N <= target_rows and block_ok(cand):
            best = cand
        cand += 8
    return best


def attention_forward(encoder_out, decoder_hidden, params, *, block_batch=None):
    """encoder_out: (B, N, E) f32; decoder_hidden: (B, D) f32."""
    B, N, E = encoder_out.shape
    _, D = decoder_hidden.shape
    A = params["we"].shape[1]

    we, be = params["we"], params["be"]          # (E, A), (1, A)
    wd, bd = params["wd"], params["bd"]          # (D, A), (1, A)
    wf, bf = params["wf"], params["bf"]          # (A, 1), (1, 1)
    wf_row = wf.reshape(1, A)                    # lane-major weight row for the logit matvec

    TB = block_batch if block_batch is not None else _pick_block_batch(B, N, E)
    assert B % TB == 0, f"block_batch {TB} must divide batch {B}"
    grid = (B // TB,)

    # NOTE(perf): for realistic sizes (E~2048, A~512) consider bf16 matmul
    # operands on v6e/v7x (keep f32 accumulation); kept f32 here for exactness.
    grid_spec = pltpu.PrefetchScalarGridSpec(
        num_scalar_prefetch=0,
        grid=grid,
        in_specs=[
            pl.BlockSpec((TB, N, E), lambda b: (b, 0, 0)),   # encoder_out
            pl.BlockSpec((TB, D),    lambda b: (b, 0)),      # decoder_hidden
            # Weights/biases: constant block index -> stay resident in VMEM,
            # not re-DMA'd per grid step.
            pl.BlockSpec((E, A),     lambda b: (0, 0)),      # We
            pl.BlockSpec((1, A),     lambda b: (0, 0)),      # be
            pl.BlockSpec((D, A),     lambda b: (0, 0)),      # Wd
            pl.BlockSpec((1, A),     lambda b: (0, 0)),      # bd
            pl.BlockSpec((1, A),     lambda b: (0, 0)),      # Wf (as a lane-major row)
            pl.BlockSpec((1, 1),     lambda b: (0, 0)),      # bf
        ],
        out_specs=[
            pl.BlockSpec((TB, E), lambda b: (b, 0)),         # context
            pl.BlockSpec((TB, N), lambda b: (b, 0)),         # alpha (lane-dense)
        ],
    )

    out_shapes = (
        jax.ShapeDtypeStruct((B, E), jnp.float32),
        jax.ShapeDtypeStruct((B, N), jnp.float32),
    )

    ctx, alpha2d = pl.pallas_call(
        _attention_kernel,
        out_shape=out_shapes,
        grid_spec=grid_spec,
        compiler_params=pltpu.CompilerParams(
            dimension_semantics=("parallel",),
            vmem_limit_bytes=32 * 1024 * 1024,   # above the 16 MiB v5e default, safe on v6e/v7x
        ),
    )(encoder_out, decoder_hidden, we, be, wd, bd, wf_row, bf)

    # Lane-dense (B, N) kernel output -> module's (B, N, 1) layout (free plumbing).
    return ctx, alpha2d[:, :, None]


def _reference_forward(encoder_out, decoder_hidden, params):
    att1 = encoder_out @ params["we"] + params["be"]               # (B, N, A)
    att2 = decoder_hidden @ params["wd"] + params["bd"]            # (B, A)
    att = jnp.tanh(att1 + att2[:, None, :])                        # (B, N, A)
    e = att @ params["wf"] + params["bf"]                          # (B, N, 1)
    alpha = jax.nn.softmax(e, axis=1)                              # (B, N, 1)
    ctx = (encoder_out * alpha).sum(axis=1)                        # (B, E)
    return ctx, alpha


if __name__ == "__main__":
    # Small shapes consistent with the module's forward. B=16 with TB=8 gives
    # a 2-step parallel grid and 128-row folded matmuls.
    B, N = 16, 16
    encoder_dim, decoder_dim, attention_dim = 64, 48, 32

    key = jax.random.PRNGKey(0)
    k = jax.random.split(key, 8)

    # PyTorch Linear: y = x @ W.T + b; weights here already stored (in, out).
    params = {
        "we": jax.random.normal(k[0], (encoder_dim, attention_dim), jnp.float32) * 0.1,
        "be": jax.random.normal(k[1], (1, attention_dim), jnp.float32) * 0.1,
        "wd": jax.random.normal(k[2], (decoder_dim, attention_dim), jnp.float32) * 0.1,
        "bd": jax.random.normal(k[3], (1, attention_dim), jnp.float32) * 0.1,
        "wf": jax.random.normal(k[4], (attention_dim, 1), jnp.float32) * 0.1,
        "bf": jax.random.normal(k[5], (1, 1), jnp.float32) * 0.1,
    }

    encoder_out = jax.random.normal(k[6], (B, N, encoder_dim), jnp.float32)
    decoder_hidden = jax.random.normal(k[7], (B, decoder_dim), jnp.float32)

    ctx, alpha = attention_forward(encoder_out, decoder_hidden, params)
    jax.block_until_ready((ctx, alpha))

    ctx_ref, alpha_ref = _reference_forward(encoder_out, decoder_hidden, params)
    assert ctx.shape == ctx_ref.shape and alpha.shape == alpha_ref.shape
    assert jnp.allclose(ctx, ctx_ref, atol=1e-5, rtol=1e-5)
    assert jnp.allclose(alpha, alpha_ref, atol=1e-5, rtol=1e-5)

    print("KERNEL_OK")
</pallas_src>

<mosaic_0001>
module attributes {stable_mosaic.version = 11 : i64} {
  func.func @_attention_kernel(%arg0: i32, %arg1: memref<8x16x64xf32, #tpu.memory_space<vmem>>, %arg2: memref<8x48xf32, #tpu.memory_space<vmem>>, %arg3: memref<64x32xf32, #tpu.memory_space<vmem>>, %arg4: memref<1x32xf32, #tpu.memory_space<vmem>>, %arg5: memref<48x32xf32, #tpu.memory_space<vmem>>, %arg6: memref<1x32xf32, #tpu.memory_space<vmem>>, %arg7: memref<1x32xf32, #tpu.memory_space<vmem>>, %arg8: memref<1x1xf32, #tpu.memory_space<vmem>>, %arg9: memref<8x64xf32, #tpu.memory_space<vmem>>, %arg10: memref<8x16xf32, #tpu.memory_space<vmem>>) attributes {dimension_semantics = [#tpu.dimension_semantics<parallel>], iteration_bounds = array<i64: 2>, scalar_prefetch = 0 : i64, scratch_operands = 0 : i64, tpu.core_type = #tpu.core_type<tc>, window_params = [{transform_indices = @transform_0, window_bounds = array<i64: 8, 16, 64>}, {transform_indices = @transform_1, window_bounds = array<i64: 8, 48>}, {pipeline_mode = #tpu.pipeline_mode<synchronous>, transform_indices = @transform_2, window_bounds = array<i64: 64, 32>}, {pipeline_mode = #tpu.pipeline_mode<synchronous>, transform_indices = @transform_3, window_bounds = array<i64: 1, 32>}, {pipeline_mode = #tpu.pipeline_mode<synchronous>, transform_indices = @transform_4, window_bounds = array<i64: 48, 32>}, {pipeline_mode = #tpu.pipeline_mode<synchronous>, transform_indices = @transform_5, window_bounds = array<i64: 1, 32>}, {pipeline_mode = #tpu.pipeline_mode<synchronous>, transform_indices = @transform_6, window_bounds = array<i64: 1, 32>}, {pipeline_mode = #tpu.pipeline_mode<synchronous>, transform_indices = @transform_7, window_bounds = array<i64: 1, 1>}, {transform_indices = @transform_8, window_bounds = array<i64: 8, 64>}, {transform_indices = @transform_9, window_bounds = array<i64: 8, 16>}]} {
    %c0 = arith.constant 0 : index
    %c0_0 = arith.constant 0 : index
    %c0_1 = arith.constant 0 : index
    %0 = vector.load %arg1[%c0, %c0_0, %c0_1] : memref<8x16x64xf32, #tpu.memory_space<vmem>>, vector<8x16x64xf32>
    %c0_2 = arith.constant 0 : index
    %c0_3 = arith.constant 0 : index
    %1 = vector.load %arg2[%c0_2, %c0_3] : memref<8x48xf32, #tpu.memory_space<vmem>>, vector<8x48xf32>
    %2 = vector.shape_cast %0 : vector<8x16x64xf32> to vector<128x64xf32>
    %c0_4 = arith.constant 0 : index
    %c0_5 = arith.constant 0 : index
    %3 = vector.load %arg3[%c0_4, %c0_5] : memref<64x32xf32, #tpu.memory_space<vmem>>, vector<64x32xf32>
    %cst = arith.constant dense<0.000000e+00> : vector<128x32xf32>
    %4 = tpu.matmul %2, %3, %cst {dimension_numbers = #tpu.dot_dimension_numbers<[1], [0], [0], [1], [0, 0, 1, 1], [], []>} : vector<128x64xf32>, vector<64x32xf32>, vector<128x32xf32> -> vector<128x32xf32>
    %c0_6 = arith.constant 0 : index
    %c0_7 = arith.constant 0 : index
    %5 = vector.load %arg4[%c0_6, %c0_7] : memref<1x32xf32, #tpu.memory_space<vmem>>, vector<1x32xf32>
    %6 = vector.broadcast %5 : vector<1x32xf32> to vector<128x32xf32>
    %7 = arith.addf %4, %6 : vector<128x32xf32>
    %c0_8 = arith.constant 0 : index
    %c0_9 = arith.constant 0 : index
    %8 = vector.load %arg5[%c0_8, %c0_9] : memref<48x32xf32, #tpu.memory_space<vmem>>, vector<48x32xf32>
    %cst_10 = arith.constant dense<0.000000e+00> : vector<8x32xf32>
    %9 = tpu.matmul %1, %8, %cst_10 {dimension_numbers = #tpu.dot_dimension_numbers<[1], [0], [0], [1], [0, 0, 1, 1], [], []>} : vector<8x48xf32>, vector<48x32xf32>, vector<8x32xf32> -> vector<8x32xf32>
    %c0_11 = arith.constant 0 : index
    %c0_12 = arith.constant 0 : index
    %10 = vector.load %arg6[%c0_11, %c0_12] : memref<1x32xf32, #tpu.memory_space<vmem>>, vector<1x32xf32>
    %11 = vector.broadcast %10 : vector<1x32xf32> to vector<8x32xf32>
    %12 = arith.addf %9, %11 : vector<8x32xf32>
    %13 = vector.shape_cast %7 : vector<128x32xf32> to vector<8x16x32xf32>
    %14 = vector.shape_cast %12 : vector<8x32xf32> to vector<8x1x32xf32>
    %15 = vector.broadcast %14 : vector<8x1x32xf32> to vector<8x16x32xf32>
    %16 = arith.addf %13, %15 : vector<8x16x32xf32>
    %17 = math.tanh %16 : vector<8x16x32xf32>
    %c0_13 = arith.constant 0 : index
    %c0_14 = arith.constant 0 : index
    %18 = vector.load %arg7[%c0_13, %c0_14] : memref<1x32xf32, #tpu.memory_space<vmem>>, vector<1x32xf32>
    %19 = vector.shape_cast %18 : vector<1x32xf32> to vector<1x1x32xf32>
    %20 = vector.broadcast %19 : vector<1x1x32xf32> to vector<8x16x32xf32>
    %21 = arith.mulf %17, %20 : vector<8x16x32xf32>
    %cst_15 = arith.constant dense<0.000000e+00> : vector<8x16xf32>
    %22 = vector.multi_reduction <add>, %21, %cst_15 [2] : vector<8x16x32xf32> to vector<8x16xf32>
    %c0_16 = arith.constant 0 : index
    %c0_17 = arith.constant 0 : index
    %23 = vector.load %arg8[%c0_16, %c0_17] : memref<1x1xf32, #tpu.memory_space<vmem>>, vector<1x1xf32>
    %24 = vector.broadcast %23 : vector<1x1xf32> to vector<8x16xf32>
    %25 = arith.addf %22, %24 : vector<8x16xf32>
    %cst_18 = arith.constant dense<0xFF800000> : vector<8xf32>
    %26 = vector.multi_reduction <maximumf>, %25, %cst_18 [1] : vector<8x16xf32> to vector<8xf32>
    %27 = vector.shape_cast %26 : vector<8xf32> to vector<8x1xf32>
    %28 = vector.broadcast %27 : vector<8x1xf32> to vector<8x16xf32>
    %29 = arith.subf %25, %28 : vector<8x16xf32>
    %30 = math.exp %29 : vector<8x16xf32>
    %cst_19 = arith.constant dense<0.000000e+00> : vector<8xf32>
    %31 = vector.multi_reduction <add>, %30, %cst_19 [1] : vector<8x16xf32> to vector<8xf32>
    %32 = vector.shape_cast %31 : vector<8xf32> to vector<8x1xf32>
    %33 = vector.broadcast %32 : vector<8x1xf32> to vector<8x16xf32>
    %34 = arith.divf %30, %33 : vector<8x16xf32>
    %35 = vector.shape_cast %34 : vector<8x16xf32> to vector<8x1x16xf32>
    "tpu.trace_start"() <{level = 10 : i32, message = "bqn,bne->bqe"}> : () -> ()
    %cst_20 = arith.constant dense<0.000000e+00> : vector<8x1x64xf32>
    %36 = tpu.matmul %35, %0, %cst_20 {dimension_numbers = #tpu.dot_dimension_numbers<[2], [1], [1], [2], [0, 0, 0, 1, 1, 2], [0], [0]>} : vector<8x1x16xf32>, vector<8x16x64xf32>, vector<8x1x64xf32> -> vector<8x1x64xf32>
    "tpu.trace_stop"() : () -> ()
    %37 = vector.shape_cast %36 : vector<8x1x64xf32> to vector<8x64xf32>
    %c0_21 = arith.constant 0 : index
    %c0_22 = arith.constant 0 : index
    %38 = vector.load %arg9[%c0_21, %c0_22] : memref<8x64xf32, #tpu.memory_space<vmem>>, vector<8x64xf32>
    tpu.vector_store %arg9[%c0_21, %c0_22], %37 {strides = array<i32>} : memref<8x64xf32, #tpu.memory_space<vmem>>, vector<8x64xf32>,
    %c0_23 = arith.constant 0 : index
    %c0_24 = arith.constant 0 : index
    %39 = vector.load %arg10[%c0_23, %c0_24] : memref<8x16xf32, #tpu.memory_space<vmem>>, vector<8x16xf32>
    tpu.vector_store %arg10[%c0_23, %c0_24], %34 {strides = array<i32>} : memref<8x16xf32, #tpu.memory_space<vmem>>, vector<8x16xf32>,
    return
  }
  func.func @transform_0(%arg0: i32) -> (i32, i32, i32) {
    %c0_i32 = arith.constant 0 : i32
    %c0_i32_0 = arith.constant 0 : i32
    %c0_i32_1 = arith.constant 0 : i32
    return %arg0, %c0_i32, %c0_i32_0 : i32, i32, i32
  }
  func.func @transform_1(%arg0: i32) -> (i32, i32) {
    %c0_i32 = arith.constant 0 : i32
    %c0_i32_0 = arith.constant 0 : i32
    return %arg0, %c0_i32 : i32, i32
  }
  func.func @transform_2(%arg0: i32) -> (i32, i32) {
    %c0_i32 = arith.constant 0 : i32
    %c0_i32_0 = arith.constant 0 : i32
    %c0_i32_1 = arith.constant 0 : i32
    return %c0_i32, %c0_i32_0 : i32, i32
  }
  func.func @transform_3(%arg0: i32) -> (i32, i32) {
    %c0_i32 = arith.constant 0 : i32
    %c0_i32_0 = arith.constant 0 : i32
    %c0_i32_1 = arith.constant 0 : i32
    return %c0_i32, %c0_i32_0 : i32, i32
  }
  func.func @transform_4(%arg0: i32) -> (i32, i32) {
    %c0_i32 = arith.constant 0 : i32
    %c0_i32_0 = arith.constant 0 : i32
    %c0_i32_1 = arith.constant 0 : i32
    return %c0_i32, %c0_i32_0 : i32, i32
  }
  func.func @transform_5(%arg0: i32) -> (i32, i32) {
    %c0_i32 = arith.constant 0 : i32
    %c0_i32_0 = arith.constant 0 : i32
    %c0_i32_1 = arith.constant 0 : i32
    return %c0_i32, %c0_i32_0 : i32, i32
  }
  func.func @transform_6(%arg0: i32) -> (i32, i32) {
    %c0_i32 = arith.constant 0 : i32
    %c0_i32_0 = arith.constant 0 : i32
    %c0_i32_1 = arith.constant 0 : i32
    return %c0_i32, %c0_i32_0 : i32, i32
  }
  func.func @transform_7(%arg0: i32) -> (i32, i32) {
    %c0_i32 = arith.constant 0 : i32
    %c0_i32_0 = arith.constant 0 : i32
    %c0_i32_1 = arith.constant 0 : i32
    return %c0_i32, %c0_i32_0 : i32, i32
  }
  func.func @transform_8(%arg0: i32) -> (i32, i32) {
    %c0_i32 = arith.constant 0 : i32
    %c0_i32_0 = arith.constant 0 : i32
    return %arg0, %c0_i32 : i32, i32
  }
  func.func @transform_9(%arg0: i32) -> (i32, i32) {
    %c0_i32 = arith.constant 0 : i32
    %c0_i32_0 = arith.constant 0 : i32
    return %arg0, %c0_i32 : i32, i32
  }
}

</mosaic_0001>

<llo_original>
// kernel: tpu_custom_call.1
$region0: #{tpu_custom_call.1}
  #allocation0 [shape = 'u32[]', space=smem, size = 0x4, offset = 0x4, fixed_abs, tag = 'smem constant byte address 0x4 - core index']
  #allocation1 [shape = 'u32[72,128]{1,0:T(1,128)}', space=vmem, size = 0x9000, scoped, tag = 'internal scratch']
  #allocation2 [shape = 'f32[1,1]{1,0:T(1,128)S(1)}', space=vmem, size = 0x200, scoped, tag = 'scoped memory for tpu_custom_call.1']
  %s0 = inlined_call_operand.hbm [shape: f32[16,16,64], index: 0, kind: input, shape index: {}]
  %s1 = inlined_call_operand.vmem [shape: f32[16,48], index: 1, kind: input, shape index: {}]
  %s2 = inlined_call_operand.vmem [shape: f32[64,32], index: 2, kind: input, shape index: {}]
  %s3 = inlined_call_operand.vmem [shape: f32[1,32], index: 3, kind: input, shape index: {}]
  %s4 = inlined_call_operand.vmem [shape: f32[48,32], index: 4, kind: input, shape index: {}]
  %s5 = inlined_call_operand.vmem [shape: f32[1,32], index: 5, kind: input, shape index: {}]
  %s6 = inlined_call_operand.vmem [shape: f32[1,32], index: 6, kind: input, shape index: {}]
  %s7 = inlined_call_operand.<no memory space> [shape: f32[1,1], index: 7, kind: input, shape index: {}]
  %s8 = inlined_call_operand.hbm [shape: f32[16,64], index: 8, kind: output, shape index: {0}]
  %s9 = inlined_call_operand.hbm [shape: f32[16,16], index: 9, kind: output, shape index: {1}]
  %10 = xla_tuple %s8, %s9
  %s11 = sld [smem:[#allocation0]]
  $region77: #{tpu_custom_call.1} parent=0
    _
  %s13 = ssub.s32 1, %s11
  %s14 = scalar_select 0, %s13, %s11
  %v15 = vstv %s7
  %16 = vst [vmem:[#allocation2] sm:$0x1] %v15
  $region1: #{tpu_custom_call.1} parent=0
    #allocation3 [shape = 'u8[131072]{0}', space=vmem, size = 0x20000, scoped, tag = 'input window, operand 0']
    #allocation4 [shape = 's32[2]{0}', space=sflag, size = 0x8, scoped, tag = 'scoped memory for tpu_custom_call.1']
    #allocation5 [shape = 's32[2]{0}', space=sflag, size = 0x8, scoped, tag = 'scoped memory for tpu_custom_call.1']
    #allocation6 [shape = 'u8[8192]{0}', space=vmem, size = 0x2000, scoped, tag = 'output window, operand 0']
    #allocation7 [shape = 'u8[8192]{0}', space=vmem, size = 0x2000, scoped, tag = 'output window, operand 1']
    #allocation8 [shape = 's32[2]{0}', space=sflag, size = 0x8, scoped, tag = 'scoped memory for tpu_custom_call.1']
    %17 = vsyncpa [#allocation4], 0
    %s18 = scalar_lea.sflag [#allocation4], 1
    %19 = vsyncpa %s18, 0
    %20 = vsyncpa [#allocation5], 0
    %s21 = scalar_lea.sflag [#allocation5], 1
    %22 = vsyncpa %s21, 0
    %23 = vsyncpa [#allocation8], 0
    %s24 = scalar_lea.sflag [#allocation8], 1
    %25 = vsyncpa %s24, 0
    loop: start=0, step=1, limit=4
    $region2: #{tpu_custom_call.1} parent=1 // loop_pre_header
      _
    $region3: #{tpu_custom_call.1} parent=1 // loop_header
      %s27 = sphi 0, %s31
      %p28 = scmp.ge.s32.totalorder %s27, 4
      %s37 = sphi 0, %s39
      %s40 = sphi 0, %s37
      %s41 = sphi 0, %s40
      %s57 = sphi 0, %s41
      %s63 = sphi 0, %s65
      %s66 = sphi 0, %s63
      %s67 = sphi 0, %s66
      %s83 = sphi 0, %s67
      %s87 = sphi 0, %s87
      %s89 = sphi 0, %s87
      %s90 = sphi 0, %s89
      %s104 = sphi 0, %s90
      %s108 = sphi 0, %s108
      %s110 = sphi 0, %s108
      %s111 = sphi 0, %s110
      %s125 = sphi 0, %s111
      %s129 = sphi 0, %s129
      %s131 = sphi 0, %s129
      %s132 = sphi 0, %s131
      %s146 = sphi 0, %s132
      %s150 = sphi 0, %s150
      %s152 = sphi 0, %s150
      %s153 = sphi 0, %s152
      %s167 = sphi 0, %s153
      %s171 = sphi 0, %s171
      %s173 = sphi 0, %s171
      %s174 = sphi 0, %s173
      %s188 = sphi 0, %s174
      %s192 = sphi 0, %s192
      %s194 = sphi 0, %s192
      %s195 = sphi 0, %s194
      %s209 = sphi 0, %s195
      %s215 = sphi 0, %s217
      %s218 = sphi 0, %s215
      %s219 = sphi 0, %s218
      %s235 = sphi 0, %s219
      %s241 = sphi 0, %s243
      %s244 = sphi 0, %s241
      %s245 = sphi 0, %s244
      %s261 = sphi 0, %s245
    $region4: #{tpu_custom_call.1} parent=1 // loop_header_branch
      %30 = sbr.rel (%p28) target = $region8
    $region5: #{tpu_custom_call.1} parent=1 // loop_body
      %s32 = ssub.s32 %s27, 1
      %s33 = ssub.s32 %s27, 2
      %s34 = sadd.s32 %s27, 1
      %s35 = ssub.s32 %s27, %s34
      %p36 = scmp.eq.s32.totalorder %s35, 0
      %s38 = sadd.s32 %s37, 1
      %s39 = scalar_select %p36, %s37, %s38
      %p42 = pneg %p36
      %p43 = scmp.eq.s32.totalorder %s27, 1
      %p44 = por %p42, %p43
      %p45 = scmp.ne.s32.totalorder %s37, %s40
      %p46 = scmp.eq.s32.totalorder %s27, 0
      %p47 = por %p45, %p46
      %p48 = scmp.ne.s32.totalorder %s37, %s40
      %p49 = scmp.eq.s32.totalorder %s32, 1
      %p50 = por %p48, %p49
      %p51 = scmp.ne.s32.totalorder %s40, %s41
      %p52 = scmp.eq.s32.totalorder %s32, 0
      %p53 = por %p51, %p52
      %p54 = scmp.ne.s32.totalorder %s40, %s41
      %p55 = scmp.eq.s32.totalorder %s33, 1
      %p56 = por %p54, %p55
      %p58 = scmp.ne.s32.totalorder %s41, %s57
      %p59 = scmp.eq.s32.totalorder %s33, 0
      %p60 = por %p58, %p59
      %s61 = ssub.s32 %s27, %s34
      %p62 = scmp.eq.s32.totalorder %s61, 0
      %s64 = sadd.s32 %s63, 1
      %s65 = scalar_select %p62, %s63, %s64
      %p68 = pneg %p62
      %p69 = scmp.eq.s32.totalorder %s27, 1
      %p70 = por %p68, %p69
      %p71 = scmp.ne.s32.totalorder %s63, %s66
      %p72 = scmp.eq.s32.totalorder %s27, 0
      %p73 = por %p71, %p72
      %p74 = scmp.ne.s32.totalorder %s63, %s66
      %p75 = scmp.eq.s32.totalorder %s32, 1
      %p76 = por %p74, %p75
      %p77 = scmp.ne.s32.totalorder %s66, %s67
      %p78 = scmp.eq.s32.totalorder %s32, 0
      %p79 = por %p77, %p78
      %p80 = scmp.ne.s32.totalorder %s66, %s67
      %p81 = scmp.eq.s32.totalorder %s33, 1
      %p82 = por %p80, %p81
      %p84 = scmp.ne.s32.totalorder %s67, %s83
      %p85 = scmp.eq.s32.totalorder %s33, 0
      %p86 = por %p84, %p85
      %s88 = sadd.s32 %s87, 1
      %p91 = scmp.eq.s32.totalorder %s27, 1
      %p92 = scmp.ne.s32.totalorder %s87, %s89
      %p93 = scmp.eq.s32.totalorder %s27, 0
      %p94 = por %p92, %p93
      %p95 = scmp.ne.s32.totalorder %s87, %s89
      %p96 = scmp.eq.s32.totalorder %s32, 1
      %p97 = por %p95, %p96
      %p98 = scmp.ne.s32.totalorder %s89, %s90
      %p99 = scmp.eq.s32.totalorder %s32, 0
      %p100 = por %p98, %p99
      %p101 = scmp.ne.s32.totalorder %s89, %s90
      %p102 = scmp.eq.s32.totalorder %s33, 1
      %p103 = por %p101, %p102
      %p105 = scmp.ne.s32.totalorder %s90, %s104
      %p106 = scmp.eq.s32.totalorder %s33, 0
      %p107 = por %p105, %p106
      %s109 = sadd.s32 %s108, 1
      %p112 = scmp.eq.s32.totalorder %s27, 1
      %p113 = scmp.ne.s32.totalorder %s108, %s110
      %p114 = scmp.eq.s32.totalorder %s27, 0
      %p115 = por %p113, %p114
      %p116 = scmp.ne.s32.totalorder %s108, %s110
      %p117 = scmp.eq.s32.totalorder %s32, 1
      %p118 = por %p116, %p117
      %p119 = scmp.ne.s32.totalorder %s110, %s111
      %p120 = scmp.eq.s32.totalorder %s32, 0
      %p121 = por %p119, %p120
      %p122 = scmp.ne.s32.totalorder %s110, %s111
      %p123 = scmp.eq.s32.totalorder %s33, 1
      %p124 = por %p122, %p123
      %p126 = scmp.ne.s32.totalorder %s111, %s125
      %p127 = scmp.eq.s32.totalorder %s33, 0
      %p128 = por %p126, %p127
      %s130 = sadd.s32 %s129, 1
      %p133 = scmp.eq.s32.totalorder %s27, 1
      %p134 = scmp.ne.s32.totalorder %s129, %s131
      %p135 = scmp.eq.s32.totalorder %s27, 0
      %p136 = por %p134, %p135
      %p137 = scmp.ne.s32.totalorder %s129, %s131
      %p138 = scmp.eq.s32.totalorder %s32, 1
      %p139 = por %p137, %p138
      %p140 = scmp.ne.s32.totalorder %s131, %s132
      %p141 = scmp.eq.s32.totalorder %s32, 0
      %p142 = por %p140, %p141
      %p143 = scmp.ne.s32.totalorder %s131, %s132
      %p144 = scmp.eq.s32.totalorder %s33, 1
      %p145 = por %p143, %p144
      %p147 = scmp.ne.s32.totalorder %s132, %s146
      %p148 = scmp.eq.s32.totalorder %s33, 0
      %p149 = por %p147, %p148
      %s151 = sadd.s32 %s150, 1
      %p154 = scmp.eq.s32.totalorder %s27, 1
      %p155 = scmp.ne.s32.totalorder %s150, %s152
      %p156 = scmp.eq.s32.totalorder %s27, 0
      %p157 = por %p155, %p156
      %p158 = scmp.ne.s32.totalorder %s150, %s152
      %p159 = scmp.eq.s32.totalorder %s32, 1
      %p160 = por %p158, %p159
      %p161 = scmp.ne.s32.totalorder %s152, %s153
      %p162 = scmp.eq.s32.totalorder %s32, 0
      %p163 = por %p161, %p162
      %p164 = scmp.ne.s32.totalorder %s152, %s153
      %p165 = scmp.eq.s32.totalorder %s33, 1
      %p166 = por %p164, %p165
      %p168 = scmp.ne.s32.totalorder %s153, %s167
      %p169 = scmp.eq.s32.totalorder %s33, 0
      %p170 = por %p168, %p169
      %s172 = sadd.s32 %s171, 1
      %p175 = scmp.eq.s32.totalorder %s27, 1
      %p176 = scmp.ne.s32.totalorder %s171, %s173
      %p177 = scmp.eq.s32.totalorder %s27, 0
      %p178 = por %p176, %p177
      %p179 = scmp.ne.s32.totalorder %s171, %s173
      %p180 = scmp.eq.s32.totalorder %s32, 1
      %p181 = por %p179, %p180
      %p182 = scmp.ne.s32.totalorder %s173, %s174
      %p183 = scmp.eq.s32.totalorder %s32, 0
      %p184 = por %p182, %p183
      %p185 = scmp.ne.s32.totalorder %s173, %s174
      %p186 = scmp.eq.s32.totalorder %s33, 1
      %p187 = por %p185, %p186
      %p189 = scmp.ne.s32.totalorder %s174, %s188
      %p190 = scmp.eq.s32.totalorder %s33, 0
      %p191 = por %p189, %p190
      %s193 = sadd.s32 %s192, 1
      %p196 = scmp.eq.s32.totalorder %s27, 1
      %p197 = scmp.ne.s32.totalorder %s192, %s194
      %p198 = scmp.eq.s32.totalorder %s27, 0
      %p199 = por %p197, %p198
      %p200 = scmp.ne.s32.totalorder %s192, %s194
      %p201 = scmp.eq.s32.totalorder %s32, 1
      %p202 = por %p200, %p201
      %p203 = scmp.ne.s32.totalorder %s194, %s195
      %p204 = scmp.eq.s32.totalorder %s32, 0
      %p205 = por %p203, %p204
      %p206 = scmp.ne.s32.totalorder %s194, %s195
      %p207 = scmp.eq.s32.totalorder %s33, 1
      %p208 = por %p206, %p207
      %p210 = scmp.ne.s32.totalorder %s195, %s209
      %p211 = scmp.eq.s32.totalorder %s33, 0
      %p212 = por %p210, %p211
      %s213 = ssub.s32 %s27, %s34
      %p214 = scmp.eq.s32.totalorder %s213, 0
      %s216 = sadd.s32 %s215, 1
      %s217 = scalar_select %p214, %s215, %s216
      %p220 = pneg %p214
      %p221 = scmp.eq.s32.totalorder %s27, 1
      %p222 = por %p220, %p221
      %p223 = scmp.ne.s32.totalorder %s215, %s218
      %p224 = scmp.eq.s32.totalorder %s27, 0
      %p225 = por %p223, %p224
      %p226 = scmp.ne.s32.totalorder %s215, %s218
      %p227 = scmp.eq.s32.totalorder %s32, 1
      %p228 = por %p226, %p227
      %p229 = scmp.ne.s32.totalorder %s218, %s219
      %p230 = scmp.eq.s32.totalorder %s32, 0
      %p231 = por %p229, %p230
      %p232 = scmp.ne.s32.totalorder %s218, %s219
      %p233 = scmp.eq.s32.totalorder %s33, 1
      %p234 = por %p232, %p233
      %p236 = scmp.ne.s32.totalorder %s219, %s235
      %p237 = scmp.eq.s32.totalorder %s33, 0
      %p238 = por %p236, %p237
      %s239 = ssub.s32 %s27, %s34
      %p240 = scmp.eq.s32.totalorder %s239, 0
      %s242 = sadd.s32 %s241, 1
      %s243 = scalar_select %p240, %s241, %s242
      %p246 = pneg %p240
      %p247 = scmp.eq.s32.totalorder %s27, 1
      %p248 = por %p246, %p247
      %p249 = scmp.ne.s32.totalorder %s241, %s244
      %p250 = scmp.eq.s32.totalorder %s27, 0
      %p251 = por %p249, %p250
      %p252 = scmp.ne.s32.totalorder %s241, %s244
      %p253 = scmp.eq.s32.totalorder %s32, 1
      %p254 = por %p252, %p253
      %p255 = scmp.ne.s32.totalorder %s244, %s245
      %p256 = scmp.eq.s32.totalorder %s32, 0
      %p257 = por %p255, %p256
      %p258 = scmp.ne.s32.totalorder %s244, %s245
      %p259 = scmp.eq.s32.totalorder %s33, 1
      %p260 = por %p258, %p259
      %p262 = scmp.ne.s32.totalorder %s245, %s261
      %p263 = scmp.eq.s32.totalorder %s33, 0
      %p264 = por %p262, %p263
      %p265 = scmp.le.s32.totalorder 1, %s27
      %p266 = scmp.lt.s32.totalorder %s27, 3
      %p267 = pnand %p265, %p266
      %p268 = pneg %p267
      // Predicated region
      $region9: #{tpu_custom_call.1} parent=5 // pred_check
        _
      $region10: #{tpu_custom_call.1} parent=5 // pred_check_branch
        %270 = sbr.rel (%p267) target = $region12
      $region11: #{tpu_custom_call.1} parent=5 // pred_region
        %s271 = ssub.s32 %s27, 1
        // Predicated region
        $region13: #{tpu_custom_call.1} parent=11 // pred_check
          %p272 = pneg %p100
        $region14: #{tpu_custom_call.1} parent=11 // pred_check_branch
          %274 = sbr.rel (%p272) target = $region16
        $region15: #{tpu_custom_call.1} parent=11 // pred_region
          _
        $region16: #{tpu_custom_call.1} parent=11 // pred_fallthru
          _
        // Predicated region
        $region17: #{tpu_custom_call.1} parent=11 // pred_check
          %p275 = pneg %p121
        $region18: #{tpu_custom_call.1} parent=11 // pred_check_branch
          %277 = sbr.rel (%p275) target = $region20
        $region19: #{tpu_custom_call.1} parent=11 // pred_region
          _
        $region20: #{tpu_custom_call.1} parent=11 // pred_fallthru
          _
        // Predicated region
        $region21: #{tpu_custom_call.1} parent=11 // pred_check
          %p278 = pneg %p142
        $region22: #{tpu_custom_call.1} parent=11 // pred_check_branch
          %280 = sbr.rel (%p278) target = $region24
        $region23: #{tpu_custom_call.1} parent=11 // pred_region
          _
        $region24: #{tpu_custom_call.1} parent=11 // pred_fallthru
          _
        // Predicated region
        $region25: #{tpu_custom_call.1} parent=11 // pred_check
          %p281 = pneg %p163
        $region26: #{tpu_custom_call.1} parent=11 // pred_check_branch
          %283 = sbr.rel (%p281) target = $region28
        $region27: #{tpu_custom_call.1} parent=11 // pred_region
          _
        $region28: #{tpu_custom_call.1} parent=11 // pred_fallthru
          _
        // Predicated region
        $region29: #{tpu_custom_call.1} parent=11 // pred_check
          %p284 = pneg %p184
        $region30: #{tpu_custom_call.1} parent=11 // pred_check_branch
          %286 = sbr.rel (%p284) target = $region32
        $region31: #{tpu_custom_call.1} parent=11 // pred_region
          _
        $region32: #{tpu_custom_call.1} parent=11 // pred_fallthru
          _
        // Predicated region
        $region33: #{tpu_custom_call.1} parent=11 // pred_check
          %p287 = pneg %p205
        $region34: #{tpu_custom_call.1} parent=11 // pred_check_branch
          %289 = sbr.rel (%p287) target = $region36
        $region35: #{tpu_custom_call.1} parent=11 // pred_region
          _
        $region36: #{tpu_custom_call.1} parent=11 // pred_fallthru
          _
      $region12: #{tpu_custom_call.1} parent=5 // pred_fallthru
        _
      %p290 = scmp.lt.s32.totalorder %s27, 2
      // Predicated region
      $region37: #{tpu_custom_call.1} parent=5 // pred_check
        %p291 = pneg %p290
      $region38: #{tpu_custom_call.1} parent=5 // pred_check_branch
        %293 = sbr.rel (%p291) target = $region40
      $region39: #{tpu_custom_call.1} parent=5 // pred_region
        // Predicated region
        $region41: #{tpu_custom_call.1} parent=39 // pred_check
          %p294 = pneg %p47
        $region42: #{tpu_custom_call.1} parent=39 // pred_check_branch
          %296 = sbr.rel (%p294) target = $region44
        $region43: #{tpu_custom_call.1} parent=39 // pred_region
          %s297 = sand.u32 %s37, 1
          %s298 = scalar_lea.sflag [#allocation4], %s297
          %s299 = sand.u32 %s37, 1
          %s300 = smul.addr %s299, 128
          %s301 = scalar_lea.vmem [#allocation3], %s300
          %s302 = smul.u32 8, %s27
          %304 = vsyncadd %s298, 0
          %s305 = smul.addr %s302, 2
          %s306 = smul.addr %s305, 8
          %s307 = scalar_lea.hbm %s0, %s306
          %s308 = sshll.u32 %s307, 4
          %s309 = int_to_ptr.hbm [resolvable:$true] %s308
          %s310 = sshll.u32 %s301, 4
          %s311 = int_to_ptr.vmem [resolvable:$true] %s310
          %316 = dma.hbm_to_vmem [thread:$0]  %s309, 2048, %s311, %s298, 128, 128, 8
        $region44: #{tpu_custom_call.1} parent=39 // pred_fallthru
          _
        // Predicated region
        $region45: #{tpu_custom_call.1} parent=39 // pred_check
          %p317 = pneg %p73
        $region46: #{tpu_custom_call.1} parent=39 // pred_check_branch
          %319 = sbr.rel (%p317) target = $region48
        $region47: #{tpu_custom_call.1} parent=39 // pred_region
          %p320 = scmp.lt.s32.totalorder %s27, 1
          %s321 = scalar_select %p320, %s27, 1
          %s322 = smul.addr %s321, 8
          %s323 = scalar_lea.vmem %s1, %s322
        $region48: #{tpu_custom_call.1} parent=39 // pred_fallthru
          _
      $region40: #{tpu_custom_call.1} parent=5 // pred_fallthru
        _
      %p324 = scmp.le.s32.totalorder 1, %s27
      %p325 = scmp.lt.s32.totalorder %s27, 3
      %p326 = pnand %p324, %p325
      %p327 = pneg %p326
      // Predicated region
      $region49: #{tpu_custom_call.1} parent=5 // pred_check
        _
      $region50: #{tpu_custom_call.1} parent=5 // pred_check_branch
        %329 = sbr.rel (%p326) target = $region52
      $region51: #{tpu_custom_call.1} parent=5 // pred_region
        %s330 = ssub.s32 %s27, 1
        %s331 = sand.u32 %s40, 1
        %s332 = scalar_lea.sflag [#allocation4], %s331
        %s333 = sand.u32 %s40, 1
        %s334 = smul.addr %s333, 128
        %s335 = scalar_lea.vmem [#allocation3], %s334
        // Predicated region
        $region53: #{tpu_custom_call.1} parent=51 // pred_check
          %p336 = pneg %p53
        $region54: #{tpu_custom_call.1} parent=51 // pred_check_branch
          %338 = sbr.rel (%p336) target = $region56
        $region55: #{tpu_custom_call.1} parent=51 // pred_region
          %340 = dma.done %s332, 2048
        $region56: #{tpu_custom_call.1} parent=51 // pred_fallthru
          _
        %s341 = sand.u32 %s40, 1
        %s342 = scalar_lea.sflag [#allocation4], %s341
        %s343 = sand.u32 %s40, 1
        %s344 = smul.addr %s343, 128
        %s345 = scalar_lea.vmem [#allocation3], %s344
        %p346 = pneg %p53
        %p347 = pneg %p50
        %p348 = scmp.lt.s32.totalorder %s32, 1
        %s349 = scalar_select %p348, %s32, 1
        %s350 = smul.addr %s349, 8
        %s351 = scalar_lea.vmem %s1, %s350
        %p352 = pneg %p79
        %p353 = pneg %p76
        %p354 = pneg %p100
        %p355 = pneg %p97
        %p356 = pneg %p121
        %p357 = pneg %p118
        %p358 = pneg %p142
        %p359 = pneg %p139
        %p360 = pneg %p163
        %p361 = pneg %p160
        %p362 = pneg %p184
        %p363 = pneg %p181
        %p364 = pneg %p205
        %p365 = pneg %p202
        %p366 = pneg %p231
        %p367 = pneg %p228
        %s368 = sand.u32 %s218, 1
        %s369 = scalar_lea.sflag [#allocation5], %s368
        %s370 = sand.u32 %s218, 1
        %s371 = smul.addr %s370, 8
        %s372 = scalar_lea.vmem [#allocation6], %s371
        %p373 = pneg %p257
        %p374 = pneg %p254
        %s375 = sand.u32 %s244, 1
        %s376 = scalar_lea.sflag [#allocation8], %s375
        %s377 = sand.u32 %s244, 1
        %s378 = smul.addr %s377, 8
        %s379 = scalar_lea.vmem [#allocation7], %s378
        %s380 = smul.u32 8, %s32
        %p381 = scmp.lt.s32.totalorder %s32, 1
        %s382 = scalar_select %p381, %s32, 1
        %s383 = smul.addr %s382, 8
        %s384 = scalar_lea.vmem %s1, %s383
        %v385 = vld [vmem:[%s335] sm:$0xff]
        %v386 = vld [vmem:[%s335 + $0x8] sm:$0xff]
        %v387 = vld [vmem:[%s335 + $0x10] sm:$0xff]
        %v388 = vld [vmem:[%s335 + $0x18] sm:$0xff]
        %v389 = vld [vmem:[%s335 + $0x20] sm:$0xff]
        %v390 = vld [vmem:[%s335 + $0x28] sm:$0xff]
        %v391 = vld [vmem:[%s335 + $0x30] sm:$0xff]
        %v392 = vld [vmem:[%s335 + $0x38] sm:$0xff]
        %v393 = vld [vmem:[%s335 + $0x40] sm:$0xff]
        %v394 = vld [vmem:[%s335 + $0x48] sm:$0xff]
        %v395 = vld [vmem:[%s335 + $0x50] sm:$0xff]
        %v396 = vld [vmem:[%s335 + $0x58] sm:$0xff]
        %v397 = vld [vmem:[%s335 + $0x60] sm:$0xff]
        %v398 = vld [vmem:[%s335 + $0x68] sm:$0xff]
        %v399 = vld [vmem:[%s335 + $0x70] sm:$0xff]
        %v400 = vld [vmem:[%s335 + $0x78] sm:$0xff]
        %v401 = vld [vmem:[%s384] sm:$0xff]
        %v402 = vld [vmem:[%s2] sm:$0xff]
        %v403 = vld [vmem:[%s2 + $0x8] sm:$0xff]
        %v404 = vld [vmem:[%s2 + $0x10] sm:$0xff]
        %v405 = vld [vmem:[%s2 + $0x18] sm:$0xff]
        %v406 = vld [vmem:[%s2 + $0x20] sm:$0xff]
        %v407 = vld [vmem:[%s2 + $0x28] sm:$0xff]
        %v408 = vld [vmem:[%s2 + $0x30] sm:$0xff]
        %v409 = vld [vmem:[%s2 + $0x38] sm:$0xff]
        %v410 = vld [vmem:[%s3] sm:$0x1]
        %v412 = vperm.slane %v410, 0
        %vm414 = vcmask 523264
        %v416 = vsel %vm414, %v385, 0
        %v419 = vsel %vm414, %v386, 0
        %v422 = vsel %vm414, %v387, 0
        %v425 = vsel %vm414, %v388, 0
        %v428 = vsel %vm414, %v389, 0
        %v431 = vsel %vm414, %v390, 0
        %v434 = vsel %vm414, %v391, 0
        %v437 = vsel %vm414, %v392, 0
        %v440 = vsel %vm414, %v393, 0
        %v443 = vsel %vm414, %v394, 0
        %v446 = vsel %vm414, %v395, 0
        %v449 = vsel %vm414, %v396, 0
        %v452 = vsel %vm414, %v397, 0
        %v455 = vsel %vm414, %v398, 0
        %v458 = vsel %vm414, %v399, 0
        %v461 = vsel %vm414, %v400, 0
        %463 = vmatpush.msra.mxu0 0.0
        %464 = vmatpush.msra.mxu0 0.0
        %465 = vmatpush.msra.mxu0 0.0
        %466 = vmatpush.msra.mxu0 0.0
        %467 = vmatpush.msra.mxu0 0.0
        %468 = vmatpush.msra.mxu0 0.0
        %469 = vmatpush.msra.mxu0 0.0
        %470 = vmatpush.msra.mxu0 0.0
        %471 = vmatpush.msra.mxu0 %v409
        %472 = vmatpush.msra.mxu0 %v408
        %473 = vmatpush.msra.mxu0 %v407
        %474 = vmatpush.msra.mxu0 %v406
        %475 = vmatpush.msra.mxu0 %v405
        %476 = vmatpush.msra.mxu0 %v404
        %477 = vmatpush.msra.mxu0 %v403
        %478 = vmatpush.msra.mxu0 %v402
        %479 = vmatmul.f32.gmra.mxu0 %v416
        %v480 = vpop.f32.mrf.mxu0
        %v481 = vadd.f32 %v412, %v480
        %482 = vmatmul.f32.gmra.mxu0 %v419
        %v483 = vpop.f32.mrf.mxu0
        %v484 = vadd.f32 %v412, %v483
        %485 = vmatmul.f32.gmra.mxu0 %v422
        %v486 = vpop.f32.mrf.mxu0
        %v487 = vadd.f32 %v412, %v486
        %488 = vmatmul.f32.gmra.mxu0 %v425
        %v489 = vpop.f32.mrf.mxu0
        %v490 = vadd.f32 %v412, %v489
        %491 = vmatmul.f32.gmra.mxu0 %v428
        %v492 = vpop.f32.mrf.mxu0
        %v493 = vadd.f32 %v412, %v492
        %494 = vmatmul.f32.gmra.mxu0 %v431
        %v495 = vpop.f32.mrf.mxu0
        %v496 = vadd.f32 %v412, %v495
        %497 = vmatmul.f32.gmra.mxu0 %v434
        %v498 = vpop.f32.mrf.mxu0
        %v499 = vadd.f32 %v412, %v498
        %500 = vmatmul.f32.gmra.mxu0 %v437
        %v501 = vpop.f32.mrf.mxu0
        %v502 = vadd.f32 %v412, %v501
        %503 = vmatmul.f32.gmra.mxu0 %v440
        %v504 = vpop.f32.mrf.mxu0
        %v505 = vadd.f32 %v412, %v504
        %506 = vmatmul.f32.gmra.mxu0 %v443
        %v507 = vpop.f32.mrf.mxu0
        %v508 = vadd.f32 %v412, %v507
        %509 = vmatmul.f32.gmra.mxu0 %v446
        %v510 = vpop.f32.mrf.mxu0
        %v511 = vadd.f32 %v412, %v510
        %512 = vmatmul.f32.gmra.mxu0 %v449
        %v513 = vpop.f32.mrf.mxu0
        %v514 = vadd.f32 %v412, %v513
        %515 = vmatmul.f32.gmra.mxu0 %v452
        %v516 = vpop.f32.mrf.mxu0
        %v517 = vadd.f32 %v412, %v516
        %518 = vmatmul.f32.gmra.mxu0 %v455
        %v519 = vpop.f32.mrf.mxu0
        %v520 = vadd.f32 %v412, %v519
        %521 = vmatmul.f32.gmra.mxu0 %v458
        %v522 = vpop.f32.mrf.mxu0
        %v523 = vadd.f32 %v412, %v522
        %524 = vmatmul.f32.gmra.mxu0 %v461
        %v525 = vpop.f32.mrf.mxu0
        %v526 = vadd.f32 %v412, %v525
        %527 = vdwg.mxu0
        %v528 = vld [vmem:[%s4] sm:$0xff]
        %v529 = vld [vmem:[%s4 + $0x8] sm:$0xff]
        %v530 = vld [vmem:[%s4 + $0x10] sm:$0xff]
        %v531 = vld [vmem:[%s4 + $0x18] sm:$0xff]
        %v532 = vld [vmem:[%s4 + $0x20] sm:$0xff]
        %v533 = vld [vmem:[%s4 + $0x28] sm:$0xff]
        %v534 = vld [vmem:[%s5] sm:$0x1]
        %v536 = vperm.slane %v534, 0
        %vm538 = vcmask 392192
        %v540 = vsel %vm538, %v401, 0
        %542 = vmatpush.msra.mxu0 0.0
        %543 = vmatpush.msra.mxu0 0.0
        %544 = vmatpush.msra.mxu0 0.0
        %545 = vmatpush.msra.mxu0 0.0
        %546 = vmatpush.msra.mxu0 0.0
        %547 = vmatpush.msra.mxu0 0.0
        %548 = vmatpush.msra.mxu0 0.0
        %549 = vmatpush.msra.mxu0 0.0
        %550 = vmatpush.msra.mxu0 0.0
        %551 = vmatpush.msra.mxu0 0.0
        %552 = vmatpush.msra.mxu0 %v533
        %553 = vmatpush.msra.mxu0 %v532
        %554 = vmatpush.msra.mxu0 %v531
        %555 = vmatpush.msra.mxu0 %v530
        %556 = vmatpush.msra.mxu0 %v529
        %557 = vmatpush.msra.mxu0 %v528
        %558 = vmatmul.f32.gmra.mxu0 %v540
        %v559 = vpop.f32.mrf.mxu0
        %v560 = vadd.f32 %v536, %v559
        %561 = vdwg.mxu0
        %v563 = vrot.slane %v560, 1
        %v564 = vrot.slane %v560, 2
        %v565 = vrot.slane %v560, 3
        %v566 = vrot.slane %v560, 4
        %v567 = vrot.slane %v560, 5
        %v568 = vrot.slane %v560, 6
        %v569 = vrot.slane %v560, 7
        %v570 = vperm.slane %v560, 0
        %v571 = vperm.slane %v563, 0
        %v572 = vperm.slane %v564, 0
        %v573 = vperm.slane %v565, 0
        %v574 = vperm.slane %v566, 0
        %v575 = vperm.slane %v567, 0
        %v576 = vperm.slane %v568, 0
        %v577 = vperm.slane %v569, 0
        %v586 = vadd.f32 %v481, %v570
        %v587 = vadd.f32 %v484, %v570
        %v588 = vadd.f32 %v487, %v571
        %v589 = vadd.f32 %v490, %v571
        %v590 = vadd.f32 %v493, %v572
        %v591 = vadd.f32 %v496, %v572
        %v592 = vadd.f32 %v499, %v573
        %v593 = vadd.f32 %v502, %v573
        %v594 = vadd.f32 %v505, %v574
        %v595 = vadd.f32 %v508, %v574
        %v596 = vadd.f32 %v511, %v575
        %v597 = vadd.f32 %v514, %v575
        %v598 = vadd.f32 %v517, %v576
        %v599 = vadd.f32 %v520, %v576
        %v600 = vadd.f32 %v523, %v577
        %v601 = vadd.f32 %v526, %v577
        %v602 = vtanh.pop %v586
        %v603 = vtanh.pop %v587
        %v604 = vtanh.pop %v588
        %v605 = vtanh.pop %v589
        %v606 = vtanh.pop %v590
        %v607 = vtanh.pop %v591
        %v608 = vtanh.pop %v592
        %v609 = vtanh.pop %v593
        %v610 = vtanh.pop %v594
        %v611 = vtanh.pop %v595
        %v612 = vtanh.pop %v596
        %v613 = vtanh.pop %v597
        %v614 = vtanh.pop %v598
        %v615 = vtanh.pop %v599
        %v616 = vtanh.pop %v600
        %v617 = vtanh.pop %v601
        %v618 = vld [vmem:[%s6] sm:$0x1]
        %v620 = vperm.slane %v618, 0
        %v622 = vmul.f32 %v602, %v620
        %v623 = vmul.f32 %v603, %v620
        %v624 = vmul.f32 %v604, %v620
        %v625 = vmul.f32 %v605, %v620
        %v626 = vmul.f32 %v606, %v620
        %v627 = vmul.f32 %v607, %v620
        %v628 = vmul.f32 %v608, %v620
        %v629 = vmul.f32 %v609, %v620
        %v630 = vmul.f32 %v610, %v620
        %v631 = vmul.f32 %v611, %v620
        %v632 = vmul.f32 %v612, %v620
        %v633 = vmul.f32 %v613, %v620
        %v634 = vmul.f32 %v614, %v620
        %v635 = vmul.f32 %v615, %v620
        %v636 = vmul.f32 %v616, %v620
        %v637 = vmul.f32 %v617, %v620
        %vm638 = vcmask 261120
        %v639 = vsel %vm638, %v622, 0.0
        %640 = vadd.xlane.f32.xlu0 %v639
        %v641 = vpop.xlane.xlu0 %640
        %v642 = vsel %vm638, %v623, 0.0
        %643 = vadd.xlane.f32.xlu0 %v642
        %v644 = vpop.xlane.xlu0 %643
        %v645 = vsel %vm638, %v624, 0.0
        %646 = vadd.xlane.f32.xlu0 %v645
        %v647 = vpop.xlane.xlu0 %646
        %v648 = vsel %vm638, %v625, 0.0
        %649 = vadd.xlane.f32.xlu0 %v648
        %v650 = vpop.xlane.xlu0 %649
        %v651 = vsel %vm638, %v626, 0.0
        %652 = vadd.xlane.f32.xlu0 %v651
        %v653 = vpop.xlane.xlu0 %652
        %v654 = vsel %vm638, %v627, 0.0
        %655 = vadd.xlane.f32.xlu0 %v654
        %v656 = vpop.xlane.xlu0 %655
        %v657 = vsel %vm638, %v628, 0.0
        %658 = vadd.xlane.f32.xlu0 %v657
        %v659 = vpop.xlane.xlu0 %658
        %v660 = vsel %vm638, %v629, 0.0
        %661 = vadd.xlane.f32.xlu0 %v660
        %v662 = vpop.xlane.xlu0 %661
        %v663 = vsel %vm638, %v630, 0.0
        %664 = vadd.xlane.f32.xlu0 %v663
        %v665 = vpop.xlane.xlu0 %664
        %v666 = vsel %vm638, %v631, 0.0
        %667 = vadd.xlane.f32.xlu0 %v666
        %v668 = vpop.xlane.xlu0 %667
        %v669 = vsel %vm638, %v632, 0.0
        %670 = vadd.xlane.f32.xlu0 %v669
        %v671 = vpop.xlane.xlu0 %670
        %v672 = vsel %vm638, %v633, 0.0
        %673 = vadd.xlane.f32.xlu0 %v672
        %v674 = vpop.xlane.xlu0 %673
        %v675 = vsel %vm638, %v634, 0.0
        %676 = vadd.xlane.f32.xlu0 %v675
        %v677 = vpop.xlane.xlu0 %676
        %v678 = vsel %vm638, %v635, 0.0
        %679 = vadd.xlane.f32.xlu0 %v678
        %v680 = vpop.xlane.xlu0 %679
        %v681 = vsel %vm638, %v636, 0.0
        %682 = vadd.xlane.f32.xlu0 %v681
        %v683 = vpop.xlane.xlu0 %682
        %v684 = vsel %vm638, %v637, 0.0
        %685 = vadd.xlane.f32.xlu0 %v684
        %v686 = vpop.xlane.xlu0 %685
        %v687 = vld [vmem:[#allocation2] sm:$0x1]
        %v689 = vperm.slane %v687, 0
        %690 = vset.pattern.permute.xlu0 0
        %691 = vperm.xlu0 %690, %v689
        %v692 = vpop.permute.xlu0 %691
        %v694 = vadd.f32 %v641, %v692
        %v695 = vadd.f32 %v644, %v692
        %v696 = vadd.f32 %v647, %v692
        %v697 = vadd.f32 %v650, %v692
        %v698 = vadd.f32 %v653, %v692
        %v699 = vadd.f32 %v656, %v692
        %v700 = vadd.f32 %v659, %v692
        %v701 = vadd.f32 %v662, %v692
        %v702 = vadd.f32 %v665, %v692
        %v703 = vadd.f32 %v668, %v692
        %v704 = vadd.f32 %v671, %v692
        %v705 = vadd.f32 %v674, %v692
        %v706 = vadd.f32 %v677, %v692
        %v707 = vadd.f32 %v680, %v692
        %v708 = vadd.f32 %v683, %v692
        %v709 = vadd.f32 %v686, %v692
        %v726 = vlaneseq
        %v727 = vand.u32 %v726, 127
        %v728 = vperm.slane %v694, %v727
        %v729 = vadd.s32 %v727, 4294967288
        %v730 = vperm.slane %v695, %v729
        %vm731 = vcmask 130112
        %v732 = vsel %vm731, %v730, %v728
        %v733 = vperm.slane %v696, %v727
        %v734 = vperm.slane %v697, %v729
        %v735 = vsel %vm731, %v734, %v733
        %v736 = vperm.slane %v698, %v727
        %v737 = vperm.slane %v699, %v729
        %v738 = vsel %vm731, %v737, %v736
        %v739 = vperm.slane %v700, %v727
        %v740 = vperm.slane %v701, %v729
        %v741 = vsel %vm731, %v740, %v739
        %v742 = vperm.slane %v702, %v727
        %v743 = vperm.slane %v703, %v729
        %v744 = vsel %vm731, %v743, %v742
        %v745 = vperm.slane %v704, %v727
        %v746 = vperm.slane %v705, %v729
        %v747 = vsel %vm731, %v746, %v745
        %v748 = vperm.slane %v706, %v727
        %v749 = vperm.slane %v707, %v729
        %v750 = vsel %vm731, %v749, %v748
        %v751 = vperm.slane %v708, %v727
        %v752 = vperm.slane %v709, %v729
        %v753 = vsel %vm731, %v752, %v751
        %vm754 = vcmask 1041409
        %v755 = vsel %vm754, %v735, %v732
        %vm756 = vcmask 1042434
        %v757 = vsel %vm756, %v738, %v755
        %vm758 = vcmask 1043459
        %v759 = vsel %vm758, %v741, %v757
        %vm760 = vcmask 1044484
        %v761 = vsel %vm760, %v744, %v759
        %vm762 = vcmask 1045509
        %v763 = vsel %vm762, %v747, %v761
        %vm764 = vcmask 1046534
        %v765 = vsel %vm764, %v750, %v763
        %vm766 = vcmask 1047559
        %v767 = vsel %vm766, %v753, %v765
        %vm769 = vcmask 130048
        %v770 = vsel %vm769, %v767, -inf
        %771 = vmax.xlane.f32.xlu0 %v770
        %v772 = vpop.xlane.xlu0 %771
        %v774 = vperm.slane %v772, 0
        %v775 = vperm.slane %v772, 1
        %v776 = vperm.slane %v772, 2
        %v777 = vperm.slane %v772, 3
        %v778 = vperm.slane %v772, 4
        %v779 = vperm.slane %v772, 5
        %v780 = vperm.slane %v772, 6
        %v781 = vperm.slane %v772, 7
        %v790 = vsub.f32 %v694, %v774
        %v791 = vsub.f32 %v695, %v774
        %v792 = vsub.f32 %v696, %v775
        %v793 = vsub.f32 %v697, %v775
        %v794 = vsub.f32 %v698, %v776
        %v795 = vsub.f32 %v699, %v776
        %v796 = vsub.f32 %v700, %v777
        %v797 = vsub.f32 %v701, %v777
        %v798 = vsub.f32 %v702, %v778
        %v799 = vsub.f32 %v703, %v778
        %v800 = vsub.f32 %v704, %v779
        %v801 = vsub.f32 %v705, %v779
        %v802 = vsub.f32 %v706, %v780
        %v803 = vsub.f32 %v707, %v780
        %v804 = vsub.f32 %v708, %v781
        %v805 = vsub.f32 %v709, %v781
        %v806 = vmul.f32 %v790, 1.442695
        %v807 = vpow.pop %v806
        %v808 = vmul.f32 %v791, 1.442695
        %v809 = vpow.pop %v808
        %v810 = vmul.f32 %v792, 1.442695
        %v811 = vpow.pop %v810
        %v812 = vmul.f32 %v793, 1.442695
        %v813 = vpow.pop %v812
        %v814 = vmul.f32 %v794, 1.442695
        %v815 = vpow.pop %v814
        %v816 = vmul.f32 %v795, 1.442695
        %v817 = vpow.pop %v816
        %v818 = vmul.f32 %v796, 1.442695
        %v819 = vpow.pop %v818
        %v820 = vmul.f32 %v797, 1.442695
        %v821 = vpow.pop %v820
        %v822 = vmul.f32 %v798, 1.442695
        %v823 = vpow.pop %v822
        %v824 = vmul.f32 %v799, 1.442695
        %v825 = vpow.pop %v824
        %v826 = vmul.f32 %v800, 1.442695
        %v827 = vpow.pop %v826
        %v828 = vmul.f32 %v801, 1.442695
        %v829 = vpow.pop %v828
        %v830 = vmul.f32 %v802, 1.442695
        %v831 = vpow.pop %v830
        %v832 = vmul.f32 %v803, 1.442695
        %v833 = vpow.pop %v832
        %v834 = vmul.f32 %v804, 1.442695
        %v835 = vpow.pop %v834
        %v836 = vmul.f32 %v805, 1.442695
        %v837 = vpow.pop %v836
        %854 = vset.pattern.permute.xlu0 0
        %855 = vperm.xlu0 %854, %v807
        %v856 = vpop.permute.xlu0 %855
        %857 = vset.pattern.permute.xlu0 0
        %858 = vperm.xlu0 %857, %v809
        %v859 = vpop.permute.xlu0 %858
        %860 = vset.pattern.permute.xlu0 0
        %861 = vperm.xlu0 %860, %v811
        %v862 = vpop.permute.xlu0 %861
        %863 = vset.pattern.permute.xlu0 0
        %864 = vperm.xlu0 %863, %v813
        %v865 = vpop.permute.xlu0 %864
        %866 = vset.pattern.permute.xlu0 0
        %867 = vperm.xlu0 %866, %v815
        %v868 = vpop.permute.xlu0 %867
        %869 = vset.pattern.permute.xlu0 0
        %870 = vperm.xlu0 %869, %v817
        %v871 = vpop.permute.xlu0 %870
        %872 = vset.pattern.permute.xlu0 0
        %873 = vperm.xlu0 %872, %v819
        %v874 = vpop.permute.xlu0 %873
        %875 = vset.pattern.permute.xlu0 0
        %876 = vperm.xlu0 %875, %v821
        %v877 = vpop.permute.xlu0 %876
        %878 = vset.pattern.permute.xlu0 0
        %879 = vperm.xlu0 %878, %v823
        %v880 = vpop.permute.xlu0 %879
        %881 = vset.pattern.permute.xlu0 0
        %882 = vperm.xlu0 %881, %v825
        %v883 = vpop.permute.xlu0 %882
        %884 = vset.pattern.permute.xlu0 0
        %885 = vperm.xlu0 %884, %v827
        %v886 = vpop.permute.xlu0 %885
        %887 = vset.pattern.permute.xlu0 0
        %888 = vperm.xlu0 %887, %v829
        %v889 = vpop.permute.xlu0 %888
        %890 = vset.pattern.permute.xlu0 0
        %891 = vperm.xlu0 %890, %v831
        %v892 = vpop.permute.xlu0 %891
        %893 = vset.pattern.permute.xlu0 0
        %894 = vperm.xlu0 %893, %v833
        %v895 = vpop.permute.xlu0 %894
        %896 = vset.pattern.permute.xlu0 0
        %897 = vperm.xlu0 %896, %v835
        %v898 = vpop.permute.xlu0 %897
        %899 = vset.pattern.permute.xlu0 0
        %900 = vperm.xlu0 %899, %v837
        %v901 = vpop.permute.xlu0 %900
        %v902 = vperm.slane %v856, %v727
        %v903 = vperm.slane %v859, %v729
        %v904 = vsel %vm731, %v903, %v902
        %v905 = vperm.slane %v862, %v727
        %v906 = vperm.slane %v865, %v729
        %v907 = vsel %vm731, %v906, %v905
        %v908 = vperm.slane %v868, %v727
        %v909 = vperm.slane %v871, %v729
        %v910 = vsel %vm731, %v909, %v908
        %v911 = vperm.slane %v874, %v727
        %v912 = vperm.slane %v877, %v729
        %v913 = vsel %vm731, %v912, %v911
        %v914 = vperm.slane %v880, %v727
        %v915 = vperm.slane %v883, %v729
        %v916 = vsel %vm731, %v915, %v914
        %v917 = vperm.slane %v886, %v727
        %v918 = vperm.slane %v889, %v729
        %v919 = vsel %vm731, %v918, %v917
        %v920 = vperm.slane %v892, %v727
        %v921 = vperm.slane %v895, %v729
        %v922 = vsel %vm731, %v921, %v920
        %v923 = vperm.slane %v898, %v727
        %v924 = vperm.slane %v901, %v729
        %v925 = vsel %vm731, %v924, %v923
        %v926 = vsel %vm754, %v907, %v904
        %v927 = vsel %vm756, %v910, %v926
        %v928 = vsel %vm758, %v913, %v927
        %v929 = vsel %vm760, %v916, %v928
        %v930 = vsel %vm762, %v919, %v929
        %v931 = vsel %vm764, %v922, %v930
        %v932 = vsel %vm766, %v925, %v931
        %v934 = vsel %vm769, %v932, 0.0
        %935 = vadd.xlane.f32.xlu0 %v934
        %v936 = vpop.xlane.xlu0 %935
        %v938 = vperm.slane %v936, 0
        %v939 = vperm.slane %v936, 1
        %v940 = vperm.slane %v936, 2
        %v941 = vperm.slane %v936, 3
        %v942 = vperm.slane %v936, 4
        %v943 = vperm.slane %v936, 5
        %v944 = vperm.slane %v936, 6
        %v945 = vperm.slane %v936, 7
        %v954 = vrcp.pop %v938
        %v955 = vmul.f32 %v938, %v954
        %v956 = vsub.f32 1.0, %v955
        %v957 = vmul.f32 %v954, %v956
        %v958 = vadd.f32 %v954, %v957
        %vm959 = vweird.f32 %v938
        %vm960 = vweird.f32 %v954
        %vm961 = vmor %vm959, %vm960
        %v962 = vsel %vm961, %v954, %v958
        %v963 = vand.u32 2147483647, %v938
        %vm964 = vcmp.eq.f32.partialorder %v963, 8.507059e+37
        %v965 = vand.u32 %v938, 2147483648
        %v966 = vor.u32 1.1754944e-38, %v965
        %v967 = vsel %vm964, %v966, %v962
        %v968 = vmul.f32 %v807, %v967
        %v969 = vmul.f32 %v809, %v967
        %v970 = vrcp.pop %v939
        %v971 = vmul.f32 %v939, %v970
        %v972 = vsub.f32 1.0, %v971
        %v973 = vmul.f32 %v970, %v972
        %v974 = vadd.f32 %v970, %v973
        %vm975 = vweird.f32 %v939
        %vm976 = vweird.f32 %v970
        %vm977 = vmor %vm975, %vm976
        %v978 = vsel %vm977, %v970, %v974
        %v979 = vand.u32 2147483647, %v939
        %vm980 = vcmp.eq.f32.partialorder %v979, 8.507059e+37
        %v981 = vand.u32 %v939, 2147483648
        %v982 = vor.u32 1.1754944e-38, %v981
        %v983 = vsel %vm980, %v982, %v978
        %v984 = vmul.f32 %v811, %v983
        %v985 = vmul.f32 %v813, %v983
        %v986 = vrcp.pop %v940
        %v987 = vmul.f32 %v940, %v986
        %v988 = vsub.f32 1.0, %v987
        %v989 = vmul.f32 %v986, %v988
        %v990 = vadd.f32 %v986, %v989
        %vm991 = vweird.f32 %v940
        %vm992 = vweird.f32 %v986
        %vm993 = vmor %vm991, %vm992
        %v994 = vsel %vm993, %v986, %v990
        %v995 = vand.u32 2147483647, %v940
        %vm996 = vcmp.eq.f32.partialorder %v995, 8.507059e+37
        %v997 = vand.u32 %v940, 2147483648
        %v998 = vor.u32 1.1754944e-38, %v997
        %v999 = vsel %vm996, %v998, %v994
        %v1000 = vmul.f32 %v815, %v999
        %v1001 = vmul.f32 %v817, %v999
        %v1002 = vrcp.pop %v941
        %v1003 = vmul.f32 %v941, %v1002
        %v1004 = vsub.f32 1.0, %v1003
        %v1005 = vmul.f32 %v1002, %v1004
        %v1006 = vadd.f32 %v1002, %v1005
        %vm1007 = vweird.f32 %v941
        %vm1008 = vweird.f32 %v1002
        %vm1009 = vmor %vm1007, %vm1008
        %v1010 = vsel %vm1009, %v1002, %v1006
        %v1011 = vand.u32 2147483647, %v941
        %vm1012 = vcmp.eq.f32.partialorder %v1011, 8.507059e+37
        %v1013 = vand.u32 %v941, 2147483648
        %v1014 = vor.u32 1.1754944e-38, %v1013
        %v1015 = vsel %vm1012, %v1014, %v1010
        %v1016 = vmul.f32 %v819, %v1015
        %v1017 = vmul.f32 %v821, %v1015
        %v1018 = vrcp.pop %v942
        %v1019 = vmul.f32 %v942, %v1018
        %v1020 = vsub.f32 1.0, %v1019
        %v1021 = vmul.f32 %v1018, %v1020
        %v1022 = vadd.f32 %v1018, %v1021
        %vm1023 = vweird.f32 %v942
        %vm1024 = vweird.f32 %v1018
        %vm1025 = vmor %vm1023, %vm1024
        %v1026 = vsel %vm1025, %v1018, %v1022
        %v1027 = vand.u32 2147483647, %v942
        %vm1028 = vcmp.eq.f32.partialorder %v1027, 8.507059e+37
        %v1029 = vand.u32 %v942, 2147483648
        %v1030 = vor.u32 1.1754944e-38, %v1029
        %v1031 = vsel %vm1028, %v1030, %v1026
        %v1032 = vmul.f32 %v823, %v1031
        %v1033 = vmul.f32 %v825, %v1031
        %v1034 = vrcp.pop %v943
        %v1035 = vmul.f32 %v943, %v1034
        %v1036 = vsub.f32 1.0, %v1035
        %v1037 = vmul.f32 %v1034, %v1036
        %v1038 = vadd.f32 %v1034, %v1037
        %vm1039 = vweird.f32 %v943
        %vm1040 = vweird.f32 %v1034
        %vm1041 = vmor %vm1039, %vm1040
        %v1042 = vsel %vm1041, %v1034, %v1038
        %v1043 = vand.u32 2147483647, %v943
        %vm1044 = vcmp.eq.f32.partialorder %v1043, 8.507059e+37
        %v1045 = vand.u32 %v943, 2147483648
        %v1046 = vor.u32 1.1754944e-38, %v1045
        %v1047 = vsel %vm1044, %v1046, %v1042
        %v1048 = vmul.f32 %v827, %v1047
        %v1049 = vmul.f32 %v829, %v1047
        %v1050 = vrcp.pop %v944
        %v1051 = vmul.f32 %v944, %v1050
        %v1052 = vsub.f32 1.0, %v1051
        %v1053 = vmul.f32 %v1050, %v1052
        %v1054 = vadd.f32 %v1050, %v1053
        %vm1055 = vweird.f32 %v944
        %vm1056 = vweird.f32 %v1050
        %vm1057 = vmor %vm1055, %vm1056
        %v1058 = vsel %vm1057, %v1050, %v1054
        %v1059 = vand.u32 2147483647, %v944
        %vm1060 = vcmp.eq.f32.partialorder %v1059, 8.507059e+37
        %v1061 = vand.u32 %v944, 2147483648
        %v1062 = vor.u32 1.1754944e-38, %v1061
        %v1063 = vsel %vm1060, %v1062, %v1058
        %v1064 = vmul.f32 %v831, %v1063
        %v1065 = vmul.f32 %v833, %v1063
        %v1066 = vrcp.pop %v945
        %v1067 = vmul.f32 %v945, %v1066
        %v1068 = vsub.f32 1.0, %v1067
        %v1069 = vmul.f32 %v1066, %v1068
        %v1070 = vadd.f32 %v1066, %v1069
        %vm1071 = vweird.f32 %v945
        %vm1072 = vweird.f32 %v1066
        %vm1073 = vmor %vm1071, %vm1072
        %v1074 = vsel %vm1073, %v1066, %v1070
        %v1075 = vand.u32 2147483647, %v945
        %vm1076 = vcmp.eq.f32.partialorder %v1075, 8.507059e+37
        %v1077 = vand.u32 %v945, 2147483648
        %v1078 = vor.u32 1.1754944e-38, %v1077
        %v1079 = vsel %vm1076, %v1078, %v1074
        %v1080 = vmul.f32 %v835, %v1079
        %v1081 = vmul.f32 %v837, %v1079
        %1084 = vset.pattern.permute.xlu0 0
        %1085 = vperm.xlu0 %1084, %v968
        %v1086 = vpop.permute.xlu0 %1085
        %1087 = vset.pattern.permute.xlu0 0
        %1088 = vperm.xlu0 %1087, %v969
        %v1089 = vpop.permute.xlu0 %1088
        %v1090 = vperm.slane %v1086, %v727
        %v1091 = vperm.slane %v1089, %v729
        %v1092 = vsel %vm731, %v1091, %v1090
        %v1093 = vsel %vm769, %v1092, 0
        %1095 = vmatpush.msra.mxu0 0.0
        %1096 = vmatpush.msra.mxu0 0.0
        %1097 = vmatpush.msra.mxu0 0.0
        %1098 = vmatpush.msra.mxu0 0.0
        %1099 = vmatpush.msra.mxu0 0.0
        %1100 = vmatpush.msra.mxu0 0.0
        %1101 = vmatpush.msra.mxu0 0.0
        %1102 = vmatpush.msra.mxu0 0.0
        %1103 = vmatpush.msra.mxu0 0.0
        %1104 = vmatpush.msra.mxu0 0.0
        %1105 = vmatpush.msra.mxu0 0.0
        %1106 = vmatpush.msra.mxu0 0.0
        %1107 = vmatpush.msra.mxu0 0.0
        %1108 = vmatpush.msra.mxu0 0.0
        %1109 = vmatpush.msra.mxu0 %v386
        %1110 = vmatpush.msra.mxu0 %v385
        %1111 = vmatmul.f32.gmra.mxu0 %v1093
        %v1112 = vpop.f32.mrf.mxu0
        %v1113 = vadd.f32 0.0, %v1112
        %1114 = vdwg.mxu0
        %1117 = vset.pattern.permute.xlu0 0
        %1118 = vperm.xlu0 %1117, %v984
        %v1119 = vpop.permute.xlu0 %1118
        %1120 = vset.pattern.permute.xlu0 0
        %1121 = vperm.xlu0 %1120, %v985
        %v1122 = vpop.permute.xlu0 %1121
        %v1123 = vperm.slane %v1119, %v727
        %v1124 = vperm.slane %v1122, %v729
        %v1125 = vsel %vm731, %v1124, %v1123
        %v1126 = vsel %vm769, %v1125, 0
        %1128 = vmatpush.msra.mxu0 0.0
        %1129 = vmatpush.msra.mxu0 0.0
        %1130 = vmatpush.msra.mxu0 0.0
        %1131 = vmatpush.msra.mxu0 0.0
        %1132 = vmatpush.msra.mxu0 0.0
        %1133 = vmatpush.msra.mxu0 0.0
        %1134 = vmatpush.msra.mxu0 0.0
        %1135 = vmatpush.msra.mxu0 0.0
        %1136 = vmatpush.msra.mxu0 0.0
        %1137 = vmatpush.msra.mxu0 0.0
        %1138 = vmatpush.msra.mxu0 0.0
        %1139 = vmatpush.msra.mxu0 0.0
        %1140 = vmatpush.msra.mxu0 0.0
        %1141 = vmatpush.msra.mxu0 0.0
        %1142 = vmatpush.msra.mxu0 %v388
        %1143 = vmatpush.msra.mxu0 %v387
        %1144 = vmatmul.f32.gmra.mxu0 %v1126
        %v1145 = vpop.f32.mrf.mxu0
        %v1146 = vadd.f32 0.0, %v1145
        %1147 = vdwg.mxu0
        %1150 = vset.pattern.permute.xlu0 0
        %1151 = vperm.xlu0 %1150, %v1000
        %v1152 = vpop.permute.xlu0 %1151
        %1153 = vset.pattern.permute.xlu0 0
        %1154 = vperm.xlu0 %1153, %v1001
        %v1155 = vpop.permute.xlu0 %1154
        %v1156 = vperm.slane %v1152, %v727
        %v1157 = vperm.slane %v1155, %v729
        %v1158 = vsel %vm731, %v1157, %v1156
        %v1159 = vsel %vm769, %v1158, 0
        %1161 = vmatpush.msra.mxu0 0.0
        %1162 = vmatpush.msra.mxu0 0.0
        %1163 = vmatpush.msra.mxu0 0.0
        %1164 = vmatpush.msra.mxu0 0.0
        %1165 = vmatpush.msra.mxu0 0.0
        %1166 = vmatpush.msra.mxu0 0.0
        %1167 = vmatpush.msra.mxu0 0.0
        %1168 = vmatpush.msra.mxu0 0.0
        %1169 = vmatpush.msra.mxu0 0.0
        %1170 = vmatpush.msra.mxu0 0.0
        %1171 = vmatpush.msra.mxu0 0.0
        %1172 = vmatpush.msra.mxu0 0.0
        %1173 = vmatpush.msra.mxu0 0.0
        %1174 = vmatpush.msra.mxu0 0.0
        %1175 = vmatpush.msra.mxu0 %v390
        %1176 = vmatpush.msra.mxu0 %v389
        %1177 = vmatmul.f32.gmra.mxu0 %v1159
        %v1178 = vpop.f32.mrf.mxu0
        %v1179 = vadd.f32 0.0, %v1178
        %1180 = vdwg.mxu0
        %1183 = vset.pattern.permute.xlu0 0
        %1184 = vperm.xlu0 %1183, %v1016
        %v1185 = vpop.permute.xlu0 %1184
        %1186 = vset.pattern.permute.xlu0 0
        %1187 = vperm.xlu0 %1186, %v1017
        %v1188 = vpop.permute.xlu0 %1187
        %v1189 = vperm.slane %v1185, %v727
        %v1190 = vperm.slane %v1188, %v729
        %v1191 = vsel %vm731, %v1190, %v1189
        %v1192 = vsel %vm769, %v1191, 0
        %1194 = vmatpush.msra.mxu0 0.0
        %1195 = vmatpush.msra.mxu0 0.0
        %1196 = vmatpush.msra.mxu0 0.0
        %1197 = vmatpush.msra.mxu0 0.0
        %1198 = vmatpush.msra.mxu0 0.0
        %1199 = vmatpush.msra.mxu0 0.0
        %1200 = vmatpush.msra.mxu0 0.0
        %1201 = vmatpush.msra.mxu0 0.0
        %1202 = vmatpush.msra.mxu0 0.0
        %1203 = vmatpush.msra.mxu0 0.0
        %1204 = vmatpush.msra.mxu0 0.0
        %1205 = vmatpush.msra.mxu0 0.0
        %1206 = vmatpush.msra.mxu0 0.0
        %1207 = vmatpush.msra.mxu0 0.0
        %1208 = vmatpush.msra.mxu0 %v392
        %1209 = vmatpush.msra.mxu0 %v391
        %1210 = vmatmul.f32.gmra.mxu0 %v1192
        %v1211 = vpop.f32.mrf.mxu0
        %v1212 = vadd.f32 0.0, %v1211
        %1213 = vdwg.mxu0
        %1216 = vset.pattern.permute.xlu0 0
        %1217 = vperm.xlu0 %1216, %v1032
        %v1218 = vpop.permute.xlu0 %1217
        %1219 = vset.pattern.permute.xlu0 0
        %1220 = vperm.xlu0 %1219, %v1033
        %v1221 = vpop.permute.xlu0 %1220
        %v1222 = vperm.slane %v1218, %v727
        %v1223 = vperm.slane %v1221, %v729
        %v1224 = vsel %vm731, %v1223, %v1222
        %v1225 = vsel %vm769, %v1224, 0
        %1227 = vmatpush.msra.mxu0 0.0
        %1228 = vmatpush.msra.mxu0 0.0
        %1229 = vmatpush.msra.mxu0 0.0
        %1230 = vmatpush.msra.mxu0 0.0
        %1231 = vmatpush.msra.mxu0 0.0
        %1232 = vmatpush.msra.mxu0 0.0
        %1233 = vmatpush.msra.mxu0 0.0
        %1234 = vmatpush.msra.mxu0 0.0
        %1235 = vmatpush.msra.mxu0 0.0
        %1236 = vmatpush.msra.mxu0 0.0
        %1237 = vmatpush.msra.mxu0 0.0
        %1238 = vmatpush.msra.mxu0 0.0
        %1239 = vmatpush.msra.mxu0 0.0
        %1240 = vmatpush.msra.mxu0 0.0
        %1241 = vmatpush.msra.mxu0 %v394
        %1242 = vmatpush.msra.mxu0 %v393
        %1243 = vmatmul.f32.gmra.mxu0 %v1225
        %v1244 = vpop.f32.mrf.mxu0
        %v1245 = vadd.f32 0.0, %v1244
        %1246 = vdwg.mxu0
        %1249 = vset.pattern.permute.xlu0 0
        %1250 = vperm.xlu0 %1249, %v1048
        %v1251 = vpop.permute.xlu0 %1250
        %1252 = vset.pattern.permute.xlu0 0
        %1253 = vperm.xlu0 %1252, %v1049
        %v1254 = vpop.permute.xlu0 %1253
        %v1255 = vperm.slane %v1251, %v727
        %v1256 = vperm.slane %v1254, %v729
        %v1257 = vsel %vm731, %v1256, %v1255
        %v1258 = vsel %vm769, %v1257, 0
        %1260 = vmatpush.msra.mxu0 0.0
        %1261 = vmatpush.msra.mxu0 0.0
        %1262 = vmatpush.msra.mxu0 0.0
        %1263 = vmatpush.msra.mxu0 0.0
        %1264 = vmatpush.msra.mxu0 0.0
        %1265 = vmatpush.msra.mxu0 0.0
        %1266 = vmatpush.msra.mxu0 0.0
        %1267 = vmatpush.msra.mxu0 0.0
        %1268 = vmatpush.msra.mxu0 0.0
        %1269 = vmatpush.msra.mxu0 0.0
        %1270 = vmatpush.msra.mxu0 0.0
        %1271 = vmatpush.msra.mxu0 0.0
        %1272 = vmatpush.msra.mxu0 0.0
        %1273 = vmatpush.msra.mxu0 0.0
        %1274 = vmatpush.msra.mxu0 %v396
        %1275 = vmatpush.msra.mxu0 %v395
        %1276 = vmatmul.f32.gmra.mxu0 %v1258
        %v1277 = vpop.f32.mrf.mxu0
        %v1278 = vadd.f32 0.0, %v1277
        %1279 = vdwg.mxu0
        %1282 = vset.pattern.permute.xlu0 0
        %1283 = vperm.xlu0 %1282, %v1064
        %v1284 = vpop.permute.xlu0 %1283
        %1285 = vset.pattern.permute.xlu0 0
        %1286 = vperm.xlu0 %1285, %v1065
        %v1287 = vpop.permute.xlu0 %1286
        %v1288 = vperm.slane %v1284, %v727
        %v1289 = vperm.slane %v1287, %v729
        %v1290 = vsel %vm731, %v1289, %v1288
        %v1291 = vsel %vm769, %v1290, 0
        %1293 = vmatpush.msra.mxu0 0.0
        %1294 = vmatpush.msra.mxu0 0.0
        %1295 = vmatpush.msra.mxu0 0.0
        %1296 = vmatpush.msra.mxu0 0.0
        %1297 = vmatpush.msra.mxu0 0.0
        %1298 = vmatpush.msra.mxu0 0.0
        %1299 = vmatpush.msra.mxu0 0.0
        %1300 = vmatpush.msra.mxu0 0.0
        %1301 = vmatpush.msra.mxu0 0.0
        %1302 = vmatpush.msra.mxu0 0.0
        %1303 = vmatpush.msra.mxu0 0.0
        %1304 = vmatpush.msra.mxu0 0.0
        %1305 = vmatpush.msra.mxu0 0.0
        %1306 = vmatpush.msra.mxu0 0.0
        %1307 = vmatpush.msra.mxu0 %v398
        %1308 = vmatpush.msra.mxu0 %v397
        %1309 = vmatmul.f32.gmra.mxu0 %v1291
        %v1310 = vpop.f32.mrf.mxu0
        %v1311 = vadd.f32 0.0, %v1310
        %1312 = vdwg.mxu0
        %1315 = vset.pattern.permute.xlu0 0
        %1316 = vperm.xlu0 %1315, %v1080
        %v1317 = vpop.permute.xlu0 %1316
        %1318 = vset.pattern.permute.xlu0 0
        %1319 = vperm.xlu0 %1318, %v1081
        %v1320 = vpop.permute.xlu0 %1319
        %v1321 = vperm.slane %v1317, %v727
        %v1322 = vperm.slane %v1320, %v729
        %v1323 = vsel %vm731, %v1322, %v1321
        %v1324 = vsel %vm769, %v1323, 0
        %1326 = vmatpush.msra.mxu0 0.0
        %1327 = vmatpush.msra.mxu0 0.0
        %1328 = vmatpush.msra.mxu0 0.0
        %1329 = vmatpush.msra.mxu0 0.0
        %1330 = vmatpush.msra.mxu0 0.0
        %1331 = vmatpush.msra.mxu0 0.0
        %1332 = vmatpush.msra.mxu0 0.0
        %1333 = vmatpush.msra.mxu0 0.0
        %1334 = vmatpush.msra.mxu0 0.0
        %1335 = vmatpush.msra.mxu0 0.0
        %1336 = vmatpush.msra.mxu0 0.0
        %1337 = vmatpush.msra.mxu0 0.0
        %1338 = vmatpush.msra.mxu0 0.0
        %1339 = vmatpush.msra.mxu0 0.0
        %1340 = vmatpush.msra.mxu0 %v400
        %1341 = vmatpush.msra.mxu0 %v399
        %1342 = vmatmul.f32.gmra.mxu0 %v1324
        %v1343 = vpop.f32.mrf.mxu0
        %v1344 = vadd.f32 0.0, %v1343
        %1345 = vdwg.mxu0
        %v1354 = vrot.slane %v1146, 7
        %v1355 = vsel %vm754, %v1354, %v1113
        %v1356 = vrot.slane %v1179, 6
        %v1357 = vsel %vm756, %v1356, %v1355
        %v1358 = vrot.slane %v1212, 5
        %v1359 = vsel %vm758, %v1358, %v1357
        %v1360 = vrot.slane %v1245, 4
        %v1361 = vsel %vm760, %v1360, %v1359
        %v1362 = vrot.slane %v1278, 3
        %v1363 = vsel %vm762, %v1362, %v1361
        %v1364 = vrot.slane %v1311, 2
        %v1365 = vsel %vm764, %v1364, %v1363
        %v1366 = vrot.slane %v1344, 1
        %v1367 = vsel %vm766, %v1366, %v1365
        %1369 = vst.msk [vmem:[%s372] sm:$0xff] %vm414, %v1367
        %v1370 = vsel %vm754, %v1125, %v1092
        %v1371 = vsel %vm756, %v1158, %v1370
        %v1372 = vsel %vm758, %v1191, %v1371
        %v1373 = vsel %vm760, %v1224, %v1372
        %v1374 = vsel %vm762, %v1257, %v1373
        %v1375 = vsel %vm764, %v1290, %v1374
        %v1376 = vsel %vm766, %v1323, %v1375
        %1378 = vst.msk [vmem:[%s379] sm:$0xff] %vm769, %v1376
        %s1379 = sand.u32 %s218, 1
        %s1380 = scalar_lea.sflag [#allocation5], %s1379
        %s1381 = sand.u32 %s218, 1
        %s1382 = smul.addr %s1381, 8
        %s1383 = scalar_lea.vmem [#allocation6], %s1382
        %s1384 = sand.u32 %s244, 1
        %s1385 = scalar_lea.sflag [#allocation8], %s1384
        %s1386 = sand.u32 %s244, 1
        %s1387 = smul.addr %s1386, 8
        %s1388 = scalar_lea.vmem [#allocation7], %s1387
        // Predicated region
        $region57: #{tpu_custom_call.1} parent=51 // pred_check
          %p1389 = pneg %p228
        $region58: #{tpu_custom_call.1} parent=51 // pred_check_branch
          %1391 = sbr.rel (%p1389) target = $region60
        $region59: #{tpu_custom_call.1} parent=51 // pred_region
          %1393 = vsyncadd %s1380, 0
          %s1394 = smul.addr %s32, 8
          %s1395 = scalar_lea.hbm %s8, %s1394
          %s1397 = sshll.u32 %s1383, 4
          %s1398 = int_to_ptr.vmem [resolvable:$true] %s1397
          %s1399 = sshll.u32 %s1395, 4
          %s1400 = int_to_ptr.hbm [resolvable:$true] %s1399
          %1402 = dma.vmem_to_hbm [thread:$0]  %s1398, 128, %s1400, %s1380
        $region60: #{tpu_custom_call.1} parent=51 // pred_fallthru
          _
        // Predicated region
        $region61: #{tpu_custom_call.1} parent=51 // pred_check
          %p1403 = pneg %p254
        $region62: #{tpu_custom_call.1} parent=51 // pred_check_branch
          %1405 = sbr.rel (%p1403) target = $region64
        $region63: #{tpu_custom_call.1} parent=51 // pred_region
          %1407 = vsyncadd %s1385, 0
          %s1408 = smul.addr %s32, 8
          %s1409 = scalar_lea.hbm %s9, %s1408
          %s1411 = sshll.u32 %s1388, 4
          %s1412 = int_to_ptr.vmem [resolvable:$true] %s1411
          %s1413 = sshll.u32 %s1409, 4
          %s1414 = int_to_ptr.hbm [resolvable:$true] %s1413
          %1416 = dma.vmem_to_hbm [thread:$0]  %s1412, 128, %s1414, %s1385
        $region64: #{tpu_custom_call.1} parent=51 // pred_fallthru
          _
      $region52: #{tpu_custom_call.1} parent=5 // pred_fallthru
        _
      %p1417 = scmp.le.s32.totalorder 2, %s27
      // Predicated region
      $region65: #{tpu_custom_call.1} parent=5 // pred_check
        %p1418 = pneg %p1417
      $region66: #{tpu_custom_call.1} parent=5 // pred_check_branch
        %1420 = sbr.rel (%p1418) target = $region68
      $region67: #{tpu_custom_call.1} parent=5 // pred_region
        %s1421 = ssub.s32 %s27, 2
        // Predicated region
        $region69: #{tpu_custom_call.1} parent=67 // pred_check
          %p1422 = pneg %p234
        $region70: #{tpu_custom_call.1} parent=67 // pred_check_branch
          %1424 = sbr.rel (%p1422) target = $region72
        $region71: #{tpu_custom_call.1} parent=67 // pred_region
          %s1425 = sand.u32 %s219, 1
          %s1426 = scalar_lea.sflag [#allocation5], %s1425
          %s1427 = sand.u32 %s219, 1
          %s1428 = smul.addr %s1427, 8
          %s1429 = scalar_lea.vmem [#allocation6], %s1428
          %1431 = dma.done %s1426, 128
        $region72: #{tpu_custom_call.1} parent=67 // pred_fallthru
          _
        // Predicated region
        $region73: #{tpu_custom_call.1} parent=67 // pred_check
          %p1432 = pneg %p260
        $region74: #{tpu_custom_call.1} parent=67 // pred_check_branch
          %1434 = sbr.rel (%p1432) target = $region76
        $region75: #{tpu_custom_call.1} parent=67 // pred_region
          %s1435 = sand.u32 %s245, 1
          %s1436 = scalar_lea.sflag [#allocation8], %s1435
          %s1437 = sand.u32 %s245, 1
          %s1438 = smul.addr %s1437, 8
          %s1439 = scalar_lea.vmem [#allocation7], %s1438
          %1441 = dma.done %s1436, 128
        $region76: #{tpu_custom_call.1} parent=67 // pred_fallthru
          _
      $region68: #{tpu_custom_call.1} parent=5 // pred_fallthru
        _
    $region6: #{tpu_custom_call.1} parent=1 // loop_footer
      %s31 = sadd.s32 1, %s27
    $region7: #{tpu_custom_call.1} parent=1 // loop_footer_branch
      %26 = sbr.rel target = $region3
    $region8: #{tpu_custom_call.1} parent=1 // loop_exit
      _
    %1442 = vsyncpa [#allocation4], 1
    %s1443 = scalar_lea.sflag [#allocation4], 1
    %1444 = vsyncpa %s1443, 1
    %1445 = vsyncpa [#allocation5], 1
    %s1446 = scalar_lea.sflag [#allocation5], 1
    %1447 = vsyncpa %s1446, 1
    %1448 = vsyncpa [#allocation8], 1
    %s1449 = scalar_lea.sflag [#allocation8], 1
    %1450 = vsyncpa %s1449, 1

</llo_original>
